<compile_context>
chip_gen: v6e
topology: v6e:2x2x1
jax: 0.10.0
libtpu: 0.0.40
codegen_flags: <defaults>
</compile_context>

<pallas_src>
import functools

import jax
import jax.numpy as jnp
from jax import lax
from jax.experimental import pallas as pl
from jax.experimental.pallas import tpu as pltpu

COMMITMENT_BETA = 0.25          # standard VQ commitment weight
SMALL_CLUSTER_THRESHOLD = 1.0   # codebook entries used < 1 time ("small"/dead)


def _round_up(n, m):
    return (n + m - 1) // m * m


# --------------------------------------------------------------------------
# Fused QAE forward kernel: encoder MLP -> residual quantization -> decoder
# --------------------------------------------------------------------------
def _qae_fused_kernel(x_ref, slab_ref, out_ref, loss_ref, small_ref, *,
                      layer_meta, n_enc, cb_off, cbt_off, cbsq_off,
                      num_levels, codebook_size, latent_dim):
    K, D = codebook_size, latent_dim
    n_dec = len(layer_meta) - n_enc

    def dense(h, meta, relu):
        off, d_in, d_out = meta
        w = slab_ref[off:off + d_in, 0:d_out]                # (d_in, d_out)
        b = slab_ref[off + d_in:off + d_in + 1, 0:d_out]     # (1, d_out)
        h = jnp.dot(h, w, preferred_element_type=jnp.float32) + b
        if relu:
            h = jnp.maximum(h, 0.0)
        return h

    # ----------------- encoder MLP (dropout = eval-mode identity) ---------
    h = x_ref[...].astype(jnp.float32)
    for i in range(n_enc):
        h = dense(h, layer_meta[i], relu=(i < n_enc - 1))
    encoded = h                                              # (N, D)

    # ----------------- residual quantization (static unroll) --------------
    # ||c||^2 for all levels was precomputed in the wrapper -> one load.
    cb_sq_all = slab_ref[cbsq_off:cbsq_off + num_levels, 0:K]   # (L, K)

    residual = encoded
    quantized = jnp.zeros_like(encoded)
    sq_acc = jnp.zeros_like(encoded)                # accumulated diff^2
    small_acc = jnp.zeros((1, K), jnp.float32)      # accumulated "is small"

    col = lax.broadcasted_iota(jnp.int32, (encoded.shape[0], K), 1)

    for lvl in range(num_levels):
        cb_t = slab_ref[cbt_off + lvl * D: cbt_off + (lvl + 1) * D, 0:K]  # (D,K)
        cb = slab_ref[cb_off + lvl * K: cb_off + (lvl + 1) * K, 0:D]      # (K,D)

        # argmin_c ||r - c||^2 == argmin_c (||c||^2 - 2 r.c)  (MXU form;
        # per-row ||r||^2 is constant and dropped).  Plain matmul: codebook
        # is pre-transposed, so no per-level XLU/weight transpose.
        cross = jnp.dot(residual, cb_t, preferred_element_type=jnp.float32)
        scores = cb_sq_all[lvl:lvl + 1, :] - 2.0 * cross      # (N, K)

        # first arg-min (ties -> smallest index) via min + iota
        min_s = jnp.min(scores, axis=-1, keepdims=True)
        idx = jnp.min(jnp.where(scores == min_s, col, K),
                      axis=-1, keepdims=True)                 # (N, 1)
        one_hot = (col == idx).astype(jnp.float32)            # (N, K)

        # gather selected code words via one-hot matmul (natural (K,D) layout)
        selected = jnp.dot(one_hot, cb,
                           preferred_element_type=jnp.float32)  # (N, D)

        # vector partials only; scalar reduces happen once after the loop
        diff = residual - selected
        sq_acc = sq_acc + diff * diff
        usage = jnp.sum(one_hot, axis=0, keepdims=True)        # (1, K)
        small_acc = small_acc + (
            usage < SMALL_CLUSTER_THRESHOLD).astype(jnp.float32)

        quantized = quantized + selected
        residual = residual - selected

    # ----------------- decoder MLP -----------------------------------------
    h = quantized
    for i in range(n_dec):
        h = dense(h, layer_meta[n_enc + i], relu=(i < n_dec - 1))

    out_ref[...] = h.astype(out_ref.dtype)

    # single final scalar reductions (XLU kept out of the level loop)
    denom = jnp.float32(encoded.shape[0] * encoded.shape[1])
    loss_ref[0] = (1.0 + COMMITMENT_BETA) * jnp.sum(sq_acc) / denom
    small_ref[0] = jnp.sum(small_acc).astype(jnp.int32)


# --------------------------------------------------------------------------
# Wrapper: pack all parameters into one slab, launch one fused kernel
# --------------------------------------------------------------------------
def qae_forward(x, params):
    """Returns (decoded, quant_loss, num_small_clusters) — matches QAE.forward."""
    enc_w, enc_b = params["enc_w"], params["enc_b"]
    dec_w, dec_b = params["dec_w"], params["dec_b"]
    codebooks = params["codebooks"]

    n, _ = x.shape
    d_out_final = dec_w[-1].shape[1]
    n_enc = len(enc_w)
    num_levels, k, d = codebooks.shape

    layers = list(zip(enc_w, enc_b)) + list(zip(dec_w, dec_b))
    max_cols = max(max(w.shape[1] for w, _ in layers), k, d)

    # ---- static slab layout (all row offsets 8-sublane aligned) ----
    layer_meta = []
    row = 0
    for w, _ in layers:
        d_in, d_out = w.shape
        layer_meta.append((row, d_in, d_out))
        row = _round_up(row + d_in + 1, 8)
    cb_off = row                                   # (L*K, D) natural layout
    row = _round_up(row + num_levels * k, 8)
    cbt_off = row                                  # (L*D, K) transposed layout
    row = _round_up(row + num_levels * d, 8)
    cbsq_off = row                                 # (L, K) precomputed ||c||^2
    row = _round_up(row + num_levels, 8)
    total_rows = row

    # ---- pack everything into a single f32 slab (one kernel-entry DMA) ----
    cb_f32 = codebooks.astype(jnp.float32)
    slab = jnp.zeros((total_rows, max_cols), jnp.float32)
    for (off, d_in, d_out), (w, b) in zip(layer_meta, layers):
        slab = slab.at[off:off + d_in, :d_out].set(w.astype(jnp.float32))
        slab = slab.at[off + d_in, :d_out].set(b.astype(jnp.float32))
    slab = slab.at[cb_off:cb_off + num_levels * k, :d].set(
        cb_f32.reshape(num_levels * k, d))
    slab = slab.at[cbt_off:cbt_off + num_levels * d, :k].set(
        jnp.transpose(cb_f32, (0, 2, 1)).reshape(num_levels * d, k))
    slab = slab.at[cbsq_off:cbsq_off + num_levels, :k].set(
        jnp.sum(cb_f32 * cb_f32, axis=-1))

    kernel = functools.partial(
        _qae_fused_kernel,
        layer_meta=tuple(layer_meta), n_enc=n_enc,
        cb_off=cb_off, cbt_off=cbt_off, cbsq_off=cbsq_off,
        num_levels=num_levels, codebook_size=k, latent_dim=d)

    vmem = pl.BlockSpec(memory_space=pltpu.MemorySpace.VMEM)
    smem = pl.BlockSpec(memory_space=pltpu.MemorySpace.SMEM)

    decoded, loss, small = pl.pallas_call(
        kernel,
        out_shape=(
            jax.ShapeDtypeStruct((n, d_out_final), jnp.float32),
            jax.ShapeDtypeStruct((1,), jnp.float32),
            jax.ShapeDtypeStruct((1,), jnp.int32),
        ),
        in_specs=[vmem, vmem],
        out_specs=(vmem, smem, smem),
    )(x.astype(jnp.float32), slab)
    return decoded, loss[0], small[0]


# --------------------------------------------------------------------------
# Parameter construction (deterministic, PyTorch-Linear-like uniform init)
# --------------------------------------------------------------------------
def _init_linear(key, d_in, d_out):
    kw, kb = jax.random.split(key)
    bound = 1.0 / jnp.sqrt(jnp.float32(d_in))
    w = jax.random.uniform(kw, (d_in, d_out), jnp.float32, -bound, bound)
    b = jax.random.uniform(kb, (d_out,), jnp.float32, -bound, bound)
    return w, b


def init_qae_params(key, input_size, hidden_sizes, latent_size,
                    num_levels, codebook_size):
    keys = jax.random.split(key, 16)
    ki = iter(keys)

    # encoder built with the original hidden_sizes order
    enc_dims = [input_size] + list(hidden_sizes) + [latent_size]
    enc_w, enc_b = [], []
    for a, b in zip(enc_dims[:-1], enc_dims[1:]):
        w, bias = _init_linear(next(ki), a, b)
        enc_w.append(w)
        enc_b.append(bias)

    # hidden_sizes.reverse() happens before building the decoder in PyTorch
    dec_hidden = list(reversed(hidden_sizes))
    dec_dims = [latent_size] + dec_hidden + [input_size]
    dec_w, dec_b = [], []
    for a, b in zip(dec_dims[:-1], dec_dims[1:]):
        w, bias = _init_linear(next(ki), a, b)
        dec_w.append(w)
        dec_b.append(bias)

    codebooks = 0.1 * jax.random.normal(
        next(ki), (num_levels, codebook_size, latent_size), jnp.float32)

    return dict(enc_w=enc_w, enc_b=enc_b,
                dec_w=dec_w, dec_b=dec_b,
                codebooks=codebooks)


if __name__ == "__main__":
    key = jax.random.PRNGKey(0)

    input_size = 16
    hidden_sizes = [32, 16]
    latent_size = 8
    num_levels = 3
    codebook_size = 16
    batch = 8

    params = init_qae_params(key, input_size, hidden_sizes, latent_size,
                             num_levels, codebook_size)

    x = jax.random.normal(jax.random.fold_in(key, 123),
                          (batch, input_size), jnp.float32)

    decoded, quant_loss, num_small = qae_forward(x, params)
    jax.block_until_ready((decoded, quant_loss, num_small))

    assert decoded.shape == (batch, input_size)
    assert quant_loss.shape == ()
    assert num_small.shape == ()
    assert bool(jnp.all(jnp.isfinite(decoded)))
    assert bool(jnp.isfinite(quant_loss))
    assert 0 <= int(num_small) <= num_levels * codebook_size
    print("KERNEL_OK")
</pallas_src>

<mosaic_0001>
module attributes {stable_mosaic.version = 11 : i64} {
  func.func @_qae_fused_kernel(%arg0: memref<8x16xf32, #tpu.memory_space<vmem>>, %arg1: memref<248x32xf32, #tpu.memory_space<vmem>>, %arg2: memref<8x16xf32, #tpu.memory_space<vmem>>, %arg3: memref<1xf32, #tpu.memory_space<smem>>, %arg4: memref<1xi32, #tpu.memory_space<smem>>) attributes {dimension_semantics = [], scalar_prefetch = 0 : i64, scratch_operands = 0 : i64, tpu.core_type = #tpu.core_type<tc>} {
    %c0 = arith.constant 0 : index
    %c0_0 = arith.constant 0 : index
    %0 = vector.load %arg0[%c0, %c0_0] : memref<8x16xf32, #tpu.memory_space<vmem>>, vector<8x16xf32>
    %c0_1 = arith.constant 0 : index
    %c0_2 = arith.constant 0 : index
    %1 = vector.load %arg1[%c0_1, %c0_2] : memref<248x32xf32, #tpu.memory_space<vmem>>, vector<16x32xf32>
    %c16 = arith.constant 16 : index
    %c0_3 = arith.constant 0 : index
    %2 = vector.load %arg1[%c16, %c0_3] : memref<248x32xf32, #tpu.memory_space<vmem>>, vector<1x32xf32>
    %cst = arith.constant dense<0.000000e+00> : vector<8x32xf32>
    %3 = tpu.matmul %0, %1, %cst {dimension_numbers = #tpu.dot_dimension_numbers<[1], [0], [0], [1], [0, 0, 1, 1], [], []>} : vector<8x16xf32>, vector<16x32xf32>, vector<8x32xf32> -> vector<8x32xf32>
    %4 = vector.broadcast %2 : vector<1x32xf32> to vector<8x32xf32>
    %5 = arith.addf %3, %4 : vector<8x32xf32>
    %cst_4 = arith.constant 0.000000e+00 : f32
    %6 = vector.broadcast %cst_4 : f32 to vector<8x32xf32>
    %7 = arith.maximumf %5, %6 : vector<8x32xf32>
    %c24 = arith.constant 24 : index
    %c0_5 = arith.constant 0 : index
    %8 = vector.load %arg1[%c24, %c0_5] : memref<248x32xf32, #tpu.memory_space<vmem>>, vector<32x16xf32>
    %c56 = arith.constant 56 : index
    %c0_6 = arith.constant 0 : index
    %9 = vector.load %arg1[%c56, %c0_6] : memref<248x32xf32, #tpu.memory_space<vmem>>, vector<1x16xf32>
    %cst_7 = arith.constant dense<0.000000e+00> : vector<8x16xf32>
    %10 = tpu.matmul %7, %8, %cst_7 {dimension_numbers = #tpu.dot_dimension_numbers<[1], [0], [0], [1], [0, 0, 1, 1], [], []>} : vector<8x32xf32>, vector<32x16xf32>, vector<8x16xf32> -> vector<8x16xf32>
    %11 = vector.broadcast %9 : vector<1x16xf32> to vector<8x16xf32>
    %12 = arith.addf %10, %11 : vector<8x16xf32>
    %cst_8 = arith.constant 0.000000e+00 : f32
    %13 = vector.broadcast %cst_8 : f32 to vector<8x16xf32>
    %14 = arith.maximumf %12, %13 : vector<8x16xf32>
    %c64 = arith.constant 64 : index
    %c0_9 = arith.constant 0 : index
    %15 = vector.load %arg1[%c64, %c0_9] : memref<248x32xf32, #tpu.memory_space<vmem>>, vector<16x8xf32>
    %c80 = arith.constant 80 : index
    %c0_10 = arith.constant 0 : index
    %16 = vector.load %arg1[%c80, %c0_10] : memref<248x32xf32, #tpu.memory_space<vmem>>, vector<1x8xf32>
    %cst_11 = arith.constant dense<0.000000e+00> : vector<8x8xf32>
    %17 = tpu.matmul %14, %15, %cst_11 {dimension_numbers = #tpu.dot_dimension_numbers<[1], [0], [0], [1], [0, 0, 1, 1], [], []>} : vector<8x16xf32>, vector<16x8xf32>, vector<8x8xf32> -> vector<8x8xf32>
    %18 = vector.broadcast %16 : vector<1x8xf32> to vector<8x8xf32>
    %19 = arith.addf %17, %18 : vector<8x8xf32>
    %c240 = arith.constant 240 : index
    %c0_12 = arith.constant 0 : index
    %20 = vector.load %arg1[%c240, %c0_12] : memref<248x32xf32, #tpu.memory_space<vmem>>, vector<3x16xf32>
    %cst_13 = arith.constant 0.000000e+00 : f32
    %21 = vector.broadcast %cst_13 : f32 to vector<8x8xf32>
    %cst_14 = arith.constant 0.000000e+00 : f32
    %22 = vector.broadcast %cst_14 : f32 to vector<8x8xf32>
    %cst_15 = arith.constant 0.000000e+00 : f32
    %23 = vector.broadcast %cst_15 : f32 to vector<1x16xf32>
    %24 = tpu.iota {dimensions = array<i32: 1>} : vector<8x16xi32>
    %c216 = arith.constant 216 : index
    %c0_16 = arith.constant 0 : index
    %25 = vector.load %arg1[%c216, %c0_16] : memref<248x32xf32, #tpu.memory_space<vmem>>, vector<8x16xf32>
    %c168 = arith.constant 168 : index
    %c0_17 = arith.constant 0 : index
    %26 = vector.load %arg1[%c168, %c0_17] : memref<248x32xf32, #tpu.memory_space<vmem>>, vector<16x8xf32>
    %cst_18 = arith.constant dense<0.000000e+00> : vector<8x16xf32>
    %27 = tpu.matmul %19, %25, %cst_18 {dimension_numbers = #tpu.dot_dimension_numbers<[1], [0], [0], [1], [0, 0, 1, 1], [], []>} : vector<8x8xf32>, vector<8x16xf32>, vector<8x16xf32> -> vector<8x16xf32>
    %28 = vector.extract_strided_slice %20 {offsets = [0, 0], sizes = [1, 16], strides = [1, 1]} : vector<3x16xf32> to vector<1x16xf32>
    %cst_19 = arith.constant 2.000000e+00 : f32
    %29 = vector.broadcast %cst_19 : f32 to vector<8x16xf32>
    %30 = arith.mulf %29, %27 : vector<8x16xf32>
    %31 = vector.broadcast %28 : vector<1x16xf32> to vector<8x16xf32>
    %32 = arith.subf %31, %30 : vector<8x16xf32>
    %cst_20 = arith.constant dense<0x7F800000> : vector<8xf32>
    %33 = vector.multi_reduction <minimumf>, %32, %cst_20 [1] : vector<8x16xf32> to vector<8xf32>
    %34 = vector.shape_cast %33 : vector<8xf32> to vector<8x1xf32>
    %35 = vector.broadcast %34 : vector<8x1xf32> to vector<8x16xf32>
    %36 = arith.cmpf oeq, %32, %35 : vector<8x16xf32>
    %c16_i32 = arith.constant 16 : i32
    %37 = vector.broadcast %c16_i32 : i32 to vector<8x16xi32>
    %38 = arith.select %36, %24, %37 : vector<8x16xi1>, vector<8x16xi32>
    %cst_21 = arith.constant dense<2147483647> : vector<8xi32>
    %39 = vector.multi_reduction <minsi>, %38, %cst_21 [1] : vector<8x16xi32> to vector<8xi32>
    %40 = vector.shape_cast %39 : vector<8xi32> to vector<8x1xi32>
    %41 = vector.broadcast %40 : vector<8x1xi32> to vector<8x16xi32>
    %42 = arith.cmpi eq, %24, %41 : vector<8x16xi32>
    %43 = arith.extui %42 : vector<8x16xi1> to vector<8x16xi32>
    %44 = arith.sitofp %43 : vector<8x16xi32> to vector<8x16xf32>
    %cst_22 = arith.constant dense<0.000000e+00> : vector<8x8xf32>
    %45 = tpu.matmul %44, %26, %cst_22 {dimension_numbers = #tpu.dot_dimension_numbers<[1], [0], [0], [1], [0, 0, 1, 1], [], []>} : vector<8x16xf32>, vector<16x8xf32>, vector<8x8xf32> -> vector<8x8xf32>
    %46 = arith.subf %19, %45 : vector<8x8xf32>
    %47 = arith.mulf %46, %46 : vector<8x8xf32>
    %48 = arith.addf %22, %47 : vector<8x8xf32>
    %cst_23 = arith.constant dense<0.000000e+00> : vector<16xf32>
    %49 = vector.multi_reduction <add>, %44, %cst_23 [0] : vector<8x16xf32> to vector<16xf32>
    %50 = vector.shape_cast %49 : vector<16xf32> to vector<1x16xf32>
    %cst_24 = arith.constant 1.000000e+00 : f32
    %51 = vector.broadcast %cst_24 : f32 to vector<1x16xf32>
    %52 = arith.cmpf olt, %50, %51 : vector<1x16xf32>
    %53 = arith.extui %52 : vector<1x16xi1> to vector<1x16xi32>
    %54 = arith.sitofp %53 : vector<1x16xi32> to vector<1x16xf32>
    %55 = arith.addf %23, %54 : vector<1x16xf32>
    %56 = arith.addf %21, %45 : vector<8x8xf32>
    %57 = arith.subf %19, %45 : vector<8x8xf32>
    %c224 = arith.constant 224 : index
    %c0_25 = arith.constant 0 : index
    %58 = vector.load %arg1[%c224, %c0_25] : memref<248x32xf32, #tpu.memory_space<vmem>>, vector<8x16xf32>
    %c184 = arith.constant 184 : index
    %c0_26 = arith.constant 0 : index
    %59 = vector.load %arg1[%c184, %c0_26] : memref<248x32xf32, #tpu.memory_space<vmem>>, vector<16x8xf32>
    %cst_27 = arith.constant dense<0.000000e+00> : vector<8x16xf32>
    %60 = tpu.matmul %57, %58, %cst_27 {dimension_numbers = #tpu.dot_dimension_numbers<[1], [0], [0], [1], [0, 0, 1, 1], [], []>} : vector<8x8xf32>, vector<8x16xf32>, vector<8x16xf32> -> vector<8x16xf32>
    %61 = vector.extract_strided_slice %20 {offsets = [1, 0], sizes = [1, 16], strides = [1, 1]} : vector<3x16xf32> to vector<1x16xf32>
    %cst_28 = arith.constant 2.000000e+00 : f32
    %62 = vector.broadcast %cst_28 : f32 to vector<8x16xf32>
    %63 = arith.mulf %62, %60 : vector<8x16xf32>
    %64 = vector.broadcast %61 : vector<1x16xf32> to vector<8x16xf32>
    %65 = arith.subf %64, %63 : vector<8x16xf32>
    %cst_29 = arith.constant dense<0x7F800000> : vector<8xf32>
    %66 = vector.multi_reduction <minimumf>, %65, %cst_29 [1] : vector<8x16xf32> to vector<8xf32>
    %67 = vector.shape_cast %66 : vector<8xf32> to vector<8x1xf32>
    %68 = vector.broadcast %67 : vector<8x1xf32> to vector<8x16xf32>
    %69 = arith.cmpf oeq, %65, %68 : vector<8x16xf32>
    %c16_i32_30 = arith.constant 16 : i32
    %70 = vector.broadcast %c16_i32_30 : i32 to vector<8x16xi32>
    %71 = arith.select %69, %24, %70 : vector<8x16xi1>, vector<8x16xi32>
    %cst_31 = arith.constant dense<2147483647> : vector<8xi32>
    %72 = vector.multi_reduction <minsi>, %71, %cst_31 [1] : vector<8x16xi32> to vector<8xi32>
    %73 = vector.shape_cast %72 : vector<8xi32> to vector<8x1xi32>
    %74 = vector.broadcast %73 : vector<8x1xi32> to vector<8x16xi32>
    %75 = arith.cmpi eq, %24, %74 : vector<8x16xi32>
    %76 = arith.extui %75 : vector<8x16xi1> to vector<8x16xi32>
    %77 = arith.sitofp %76 : vector<8x16xi32> to vector<8x16xf32>
    %cst_32 = arith.constant dense<0.000000e+00> : vector<8x8xf32>
    %78 = tpu.matmul %77, %59, %cst_32 {dimension_numbers = #tpu.dot_dimension_numbers<[1], [0], [0], [1], [0, 0, 1, 1], [], []>} : vector<8x16xf32>, vector<16x8xf32>, vector<8x8xf32> -> vector<8x8xf32>
    %79 = arith.subf %57, %78 : vector<8x8xf32>
    %80 = arith.mulf %79, %79 : vector<8x8xf32>
    %81 = arith.addf %48, %80 : vector<8x8xf32>
    %cst_33 = arith.constant dense<0.000000e+00> : vector<16xf32>
    %82 = vector.multi_reduction <add>, %77, %cst_33 [0] : vector<8x16xf32> to vector<16xf32>
    %83 = vector.shape_cast %82 : vector<16xf32> to vector<1x16xf32>
    %cst_34 = arith.constant 1.000000e+00 : f32
    %84 = vector.broadcast %cst_34 : f32 to vector<1x16xf32>
    %85 = arith.cmpf olt, %83, %84 : vector<1x16xf32>
    %86 = arith.extui %85 : vector<1x16xi1> to vector<1x16xi32>
    %87 = arith.sitofp %86 : vector<1x16xi32> to vector<1x16xf32>
    %88 = arith.addf %55, %87 : vector<1x16xf32>
    %89 = arith.addf %56, %78 : vector<8x8xf32>
    %90 = arith.subf %57, %78 : vector<8x8xf32>
    %c232 = arith.constant 232 : index
    %c0_35 = arith.constant 0 : index
    %91 = vector.load %arg1[%c232, %c0_35] : memref<248x32xf32, #tpu.memory_space<vmem>>, vector<8x16xf32>
    %c200 = arith.constant 200 : index
    %c0_36 = arith.constant 0 : index
    %92 = vector.load %arg1[%c200, %c0_36] : memref<248x32xf32, #tpu.memory_space<vmem>>, vector<16x8xf32>
    %cst_37 = arith.constant dense<0.000000e+00> : vector<8x16xf32>
    %93 = tpu.matmul %90, %91, %cst_37 {dimension_numbers = #tpu.dot_dimension_numbers<[1], [0], [0], [1], [0, 0, 1, 1], [], []>} : vector<8x8xf32>, vector<8x16xf32>, vector<8x16xf32> -> vector<8x16xf32>
    %94 = vector.extract_strided_slice %20 {offsets = [2, 0], sizes = [1, 16], strides = [1, 1]} : vector<3x16xf32> to vector<1x16xf32>
    %cst_38 = arith.constant 2.000000e+00 : f32
    %95 = vector.broadcast %cst_38 : f32 to vector<8x16xf32>
    %96 = arith.mulf %95, %93 : vector<8x16xf32>
    %97 = vector.broadcast %94 : vector<1x16xf32> to vector<8x16xf32>
    %98 = arith.subf %97, %96 : vector<8x16xf32>
    %cst_39 = arith.constant dense<0x7F800000> : vector<8xf32>
    %99 = vector.multi_reduction <minimumf>, %98, %cst_39 [1] : vector<8x16xf32> to vector<8xf32>
    %100 = vector.shape_cast %99 : vector<8xf32> to vector<8x1xf32>
    %101 = vector.broadcast %100 : vector<8x1xf32> to vector<8x16xf32>
    %102 = arith.cmpf oeq, %98, %101 : vector<8x16xf32>
    %c16_i32_40 = arith.constant 16 : i32
    %103 = vector.broadcast %c16_i32_40 : i32 to vector<8x16xi32>
    %104 = arith.select %102, %24, %103 : vector<8x16xi1>, vector<8x16xi32>
    %cst_41 = arith.constant dense<2147483647> : vector<8xi32>
    %105 = vector.multi_reduction <minsi>, %104, %cst_41 [1] : vector<8x16xi32> to vector<8xi32>
    %106 = vector.shape_cast %105 : vector<8xi32> to vector<8x1xi32>
    %107 = vector.broadcast %106 : vector<8x1xi32> to vector<8x16xi32>
    %108 = arith.cmpi eq, %24, %107 : vector<8x16xi32>
    %109 = arith.extui %108 : vector<8x16xi1> to vector<8x16xi32>
    %110 = arith.sitofp %109 : vector<8x16xi32> to vector<8x16xf32>
    %cst_42 = arith.constant dense<0.000000e+00> : vector<8x8xf32>
    %111 = tpu.matmul %110, %92, %cst_42 {dimension_numbers = #tpu.dot_dimension_numbers<[1], [0], [0], [1], [0, 0, 1, 1], [], []>} : vector<8x16xf32>, vector<16x8xf32>, vector<8x8xf32> -> vector<8x8xf32>
    %112 = arith.subf %90, %111 : vector<8x8xf32>
    %113 = arith.mulf %112, %112 : vector<8x8xf32>
    %114 = arith.addf %81, %113 : vector<8x8xf32>
    %cst_43 = arith.constant dense<0.000000e+00> : vector<16xf32>
    %115 = vector.multi_reduction <add>, %110, %cst_43 [0] : vector<8x16xf32> to vector<16xf32>
    %116 = vector.shape_cast %115 : vector<16xf32> to vector<1x16xf32>
    %cst_44 = arith.constant 1.000000e+00 : f32
    %117 = vector.broadcast %cst_44 : f32 to vector<1x16xf32>
    %118 = arith.cmpf olt, %116, %117 : vector<1x16xf32>
    %119 = arith.extui %118 : vector<1x16xi1> to vector<1x16xi32>
    %120 = arith.sitofp %119 : vector<1x16xi32> to vector<1x16xf32>
    %121 = arith.addf %88, %120 : vector<1x16xf32>
    %122 = arith.addf %89, %111 : vector<8x8xf32>
    %c88 = arith.constant 88 : index
    %c0_45 = arith.constant 0 : index
    %123 = vector.load %arg1[%c88, %c0_45] : memref<248x32xf32, #tpu.memory_space<vmem>>, vector<8x16xf32>
    %c96 = arith.constant 96 : index
    %c0_46 = arith.constant 0 : index
    %124 = vector.load %arg1[%c96, %c0_46] : memref<248x32xf32, #tpu.memory_space<vmem>>, vector<1x16xf32>
    %cst_47 = arith.constant dense<0.000000e+00> : vector<8x16xf32>
    %125 = tpu.matmul %122, %123, %cst_47 {dimension_numbers = #tpu.dot_dimension_numbers<[1], [0], [0], [1], [0, 0, 1, 1], [], []>} : vector<8x8xf32>, vector<8x16xf32>, vector<8x16xf32> -> vector<8x16xf32>
    %126 = vector.broadcast %124 : vector<1x16xf32> to vector<8x16xf32>
    %127 = arith.addf %125, %126 : vector<8x16xf32>
    %cst_48 = arith.constant 0.000000e+00 : f32
    %128 = vector.broadcast %cst_48 : f32 to vector<8x16xf32>
    %129 = arith.maximumf %127, %128 : vector<8x16xf32>
    %c104 = arith.constant 104 : index
    %c0_49 = arith.constant 0 : index
    %130 = vector.load %arg1[%c104, %c0_49] : memref<248x32xf32, #tpu.memory_space<vmem>>, vector<16x32xf32>
    %c120 = arith.constant 120 : index
    %c0_50 = arith.constant 0 : index
    %131 = vector.load %arg1[%c120, %c0_50] : memref<248x32xf32, #tpu.memory_space<vmem>>, vector<1x32xf32>
    %cst_51 = arith.constant dense<0.000000e+00> : vector<8x32xf32>
    %132 = tpu.matmul %129, %130, %cst_51 {dimension_numbers = #tpu.dot_dimension_numbers<[1], [0], [0], [1], [0, 0, 1, 1], [], []>} : vector<8x16xf32>, vector<16x32xf32>, vector<8x32xf32> -> vector<8x32xf32>
    %133 = vector.broadcast %131 : vector<1x32xf32> to vector<8x32xf32>
    %134 = arith.addf %132, %133 : vector<8x32xf32>
    %cst_52 = arith.constant 0.000000e+00 : f32
    %135 = vector.broadcast %cst_52 : f32 to vector<8x32xf32>
    %136 = arith.maximumf %134, %135 : vector<8x32xf32>
    %c128 = arith.constant 128 : index
    %c0_53 = arith.constant 0 : index
    %137 = vector.load %arg1[%c128, %c0_53] : memref<248x32xf32, #tpu.memory_space<vmem>>, vector<32x16xf32>
    %c160 = arith.constant 160 : index
    %c0_54 = arith.constant 0 : index
    %138 = vector.load %arg1[%c160, %c0_54] : memref<248x32xf32, #tpu.memory_space<vmem>>, vector<1x16xf32>
    %cst_55 = arith.constant dense<0.000000e+00> : vector<8x16xf32>
    %139 = tpu.matmul %136, %137, %cst_55 {dimension_numbers = #tpu.dot_dimension_numbers<[1], [0], [0], [1], [0, 0, 1, 1], [], []>} : vector<8x32xf32>, vector<32x16xf32>, vector<8x16xf32> -> vector<8x16xf32>
    %140 = vector.broadcast %138 : vector<1x16xf32> to vector<8x16xf32>
    %141 = arith.addf %139, %140 : vector<8x16xf32>
    %c0_56 = arith.constant 0 : index
    %c0_57 = arith.constant 0 : index
    %142 = vector.load %arg2[%c0_56, %c0_57] : memref<8x16xf32, #tpu.memory_space<vmem>>, vector<8x16xf32>
    tpu.vector_store %arg2[%c0_56, %c0_57], %141 {strides = array<i32>} : memref<8x16xf32, #tpu.memory_space<vmem>>, vector<8x16xf32>,
    %143 = vector.shape_cast %114 : vector<8x8xf32> to vector<1x8x8xf32>
    %cst_58 = arith.constant dense<0.000000e+00> : vector<1xf32>
    %144 = vector.multi_reduction <add>, %143, %cst_58 [1, 2] : vector<1x8x8xf32> to vector<1xf32>
    %145 = vector.shape_cast %144 : vector<1xf32> to vector<1x1x1xf32>
    %146 = vector.extract %145[0, 0, 0] : f32 from vector<1x1x1xf32>
    %cst_59 = arith.constant 1.250000e+00 : f32
    %147 = arith.mulf %cst_59, %146 : f32
    %cst_60 = arith.constant 6.400000e+01 : f32
    %148 = arith.divf %147, %cst_60 : f32
    %c0_61 = arith.constant 0 : index
    %149 = memref.load %arg3[%c0_61] : memref<1xf32, #tpu.memory_space<smem>>
    memref.store %148, %arg3[%c0_61] : memref<1xf32, #tpu.memory_space<smem>>
    %150 = vector.shape_cast %121 : vector<1x16xf32> to vector<1x1x16xf32>
    %cst_62 = arith.constant dense<0.000000e+00> : vector<1xf32>
    %151 = vector.multi_reduction <add>, %150, %cst_62 [1, 2] : vector<1x1x16xf32> to vector<1xf32>
    %152 = vector.shape_cast %151 : vector<1xf32> to vector<1x1x1xf32>
    %153 = vector.extract %152[0, 0, 0] : f32 from vector<1x1x1xf32>
    %154 = arith.fptosi %153 : f32 to i32
    %c0_63 = arith.constant 0 : index
    %155 = memref.load %arg4[%c0_63] : memref<1xi32, #tpu.memory_space<smem>>
    memref.store %154, %arg4[%c0_63] : memref<1xi32, #tpu.memory_space<smem>>
    return
  }
}

</mosaic_0001>

<llo_original>
// kernel: tpu_custom_call.1
$region0: #{tpu_custom_call.1}
  #allocation0 [shape = 'u32[]', space=smem, size = 0x4, offset = 0x4, fixed_abs, tag = 'smem constant byte address 0x4 - core index']
  #allocation1 [shape = 'u32[144,128]{1,0:T(1,128)}', space=vmem, size = 0x12000, scoped, tag = 'internal scratch']
  %s0 = inlined_call_operand.vmem [shape: f32[8,16], index: 0, kind: input, shape index: {}]
  %s1 = inlined_call_operand.vmem [shape: f32[248,32], index: 1, kind: input, shape index: {}]
  %s2 = inlined_call_operand.hbm [shape: f32[8,16], index: 2, kind: output, shape index: {0}]
  %s3 = inlined_call_operand.hbm [shape: f32[1], index: 3, kind: output, shape index: {1}]
  %s4 = inlined_call_operand.hbm [shape: s32[1], index: 4, kind: output, shape index: {2}]
  %5 = xla_tuple %s2, %s3, %s4
  %s6 = sld [smem:[#allocation0]]
  $region34: #{tpu_custom_call.1} parent=0
    _
  %s8 = ssub.s32 1, %s6
  %s9 = scalar_select 0, %s8, %s6
  $region1: #{tpu_custom_call.1} parent=0
    #allocation2 [shape = 'u8[4096]{0}', space=vmem, size = 0x1000, scoped, tag = 'output window, operand 0, single buffered']
    #allocation3 [shape = 's32[1]{0}', space=sflag, size = 0x4, scoped, tag = 'scoped memory for tpu_custom_call.1']
    #allocation4 [shape = 's32[1]{0}', space=sflag, size = 0x4, scoped, tag = 'scoped memory for tpu_custom_call.1']
    #allocation5 [shape = 'u8[512]{0}', space=smem, size = 0x200, scoped, tag = 'output window, operand 1, single buffered']
    #allocation6 [shape = 'u8[512]{0}', space=smem, size = 0x200, scoped, tag = 'output window, operand 2, single buffered']
    #allocation7 [shape = 's32[1]{0}', space=sflag, size = 0x4, scoped, tag = 'scoped memory for tpu_custom_call.1']
    %10 = vsyncpa [#allocation3], 0
    %11 = vsyncpa [#allocation4], 0
    %12 = vsyncpa [#allocation7], 0
    // Predicated region
    $region2: #{tpu_custom_call.1} parent=1 // pred_check
      _
    $region3: #{tpu_custom_call.1} parent=1 // pred_check_branch
      %14 = sbr.rel (0) target = $region5
    $region4: #{tpu_custom_call.1} parent=1 // pred_region
      _
    $region5: #{tpu_custom_call.1} parent=1 // pred_fallthru
      _
    // Predicated region
    $region6: #{tpu_custom_call.1} parent=1 // pred_check
      _
    $region7: #{tpu_custom_call.1} parent=1 // pred_check_branch
      %16 = sbr.rel (0) target = $region9
    $region8: #{tpu_custom_call.1} parent=1 // pred_region
      _
    $region9: #{tpu_custom_call.1} parent=1 // pred_fallthru
      _
    %v17 = vld [vmem:[%s0] sm:$0xff]
    %v18 = vld [vmem:[%s1] sm:$0xff]
    %v19 = vld [vmem:[%s1 + $0x8] sm:$0xff]
    %v20 = vld [vmem:[%s1 + $0x10] sm:$0x1]
    %v21 = vlaneseq
    %v22 = vshrl.u32 %v21, 7
    %v23 = vsub.s32 0, %v22
    %v24 = vrot.slane %v20, %v23
    %vm25 = vcmask 130048
    %v27 = vsel %vm25, %v17, 0
    %29 = vmatprep.subr.mxu0 0.0
    %30 = vmatpush1.msra.mxu0 0.0
    %31 = vmatprep.subr.mxu0 0.0
    %32 = vmatpush1.msra.mxu0 0.0
    %33 = vmatprep.subr.mxu0 0.0
    %34 = vmatpush1.msra.mxu0 0.0
    %35 = vmatprep.subr.mxu0 0.0
    %36 = vmatpush1.msra.mxu0 0.0
    %37 = vmatprep.subr.mxu0 0.0
    %38 = vmatpush1.msra.mxu0 0.0
    %39 = vmatprep.subr.mxu0 0.0
    %40 = vmatpush1.msra.mxu0 0.0
    %41 = vmatprep.subr.mxu0 0.0
    %42 = vmatpush1.msra.mxu0 0.0
    %43 = vmatprep.subr.mxu0 0.0
    %44 = vmatpush1.msra.mxu0 0.0
    %45 = vmatprep.subr.mxu0 0.0
    %46 = vmatpush1.msra.mxu0 0.0
    %47 = vmatprep.subr.mxu0 0.0
    %48 = vmatpush1.msra.mxu0 0.0
    %49 = vmatprep.subr.mxu0 0.0
    %50 = vmatpush1.msra.mxu0 0.0
    %51 = vmatprep.subr.mxu0 0.0
    %52 = vmatpush1.msra.mxu0 0.0
    %53 = vmatprep.subr.mxu0 0.0
    %54 = vmatpush1.msra.mxu0 0.0
    %55 = vmatprep.subr.mxu0 0.0
    %56 = vmatpush1.msra.mxu0 0.0
    %57 = vmatprep.subr.mxu0 0.0
    %58 = vmatpush1.msra.mxu0 %v19
    %59 = vmatprep.subr.mxu0 0.0
    %60 = vmatpush1.msra.mxu0 %v18
    %61 = vmatprep.subr.mxu0 0.0
    %62 = vmatpush2.msra.mxu0 0.0
    %63 = vmatprep.subr.mxu0 0.0
    %64 = vmatpush2.msra.mxu0 0.0
    %65 = vmatprep.subr.mxu0 0.0
    %66 = vmatpush2.msra.mxu0 0.0
    %67 = vmatprep.subr.mxu0 0.0
    %68 = vmatpush2.msra.mxu0 0.0
    %69 = vmatprep.subr.mxu0 0.0
    %70 = vmatpush2.msra.mxu0 0.0
    %71 = vmatprep.subr.mxu0 0.0
    %72 = vmatpush2.msra.mxu0 0.0
    %73 = vmatprep.subr.mxu0 0.0
    %74 = vmatpush2.msra.mxu0 0.0
    %75 = vmatprep.subr.mxu0 0.0
    %76 = vmatpush2.msra.mxu0 0.0
    %77 = vmatprep.subr.mxu0 0.0
    %78 = vmatpush2.msra.mxu0 0.0
    %79 = vmatprep.subr.mxu0 0.0
    %80 = vmatpush2.msra.mxu0 0.0
    %81 = vmatprep.subr.mxu0 0.0
    %82 = vmatpush2.msra.mxu0 0.0
    %83 = vmatprep.subr.mxu0 0.0
    %84 = vmatpush2.msra.mxu0 0.0
    %85 = vmatprep.subr.mxu0 0.0
    %86 = vmatpush2.msra.mxu0 0.0
    %87 = vmatprep.subr.mxu0 0.0
    %88 = vmatpush2.msra.mxu0 0.0
    %89 = vmatprep.subr.mxu0 0.0
    %90 = vmatpush2.msra.mxu0 0.0
    %91 = vmatprep.subr.mxu0 0.0
    %92 = vmatpush2.msra.mxu0 0.0
    %93 = vmatprep.mubr.f32.mxu0 0.0
    %94 = vmatmul.mubr.f32.gmra.mxu0 %v27
    %v95 = vpop.f32.mrf.mxu0
    %v96 = vadd.f32 %v24, %v95
    %v97 = vpop.f32.mrf.mxu0
    %98 = vdwg.mxu0
    %v99 = vmax.f32 %v96, 0.0
    %v100 = vld [vmem:[%s1 + $0x18] sm:$0xff]
    %v101 = vld [vmem:[%s1 + $0x20] sm:$0xff]
    %v102 = vld [vmem:[%s1 + $0x28] sm:$0xff]
    %v103 = vld [vmem:[%s1 + $0x30] sm:$0xff]
    %v104 = vld [vmem:[%s1 + $0x38] sm:$0x1]
    %v105 = vlaneseq
    %v106 = vshrl.u32 %v105, 7
    %v107 = vsub.s32 0, %v106
    %v108 = vrot.slane %v104, %v107
    %vm109 = vcmask 261120
    %v111 = vsel %vm109, %v99, 0
    %113 = vmatprep.subr.mxu0 0.0
    %114 = vmatpush1.msra.mxu0 0.0
    %115 = vmatprep.subr.mxu0 0.0
    %116 = vmatpush1.msra.mxu0 0.0
    %117 = vmatprep.subr.mxu0 0.0
    %118 = vmatpush1.msra.mxu0 0.0
    %119 = vmatprep.subr.mxu0 0.0
    %120 = vmatpush1.msra.mxu0 0.0
    %121 = vmatprep.subr.mxu0 0.0
    %122 = vmatpush1.msra.mxu0 0.0
    %123 = vmatprep.subr.mxu0 0.0
    %124 = vmatpush1.msra.mxu0 0.0
    %125 = vmatprep.subr.mxu0 0.0
    %126 = vmatpush1.msra.mxu0 0.0
    %127 = vmatprep.subr.mxu0 0.0
    %128 = vmatpush1.msra.mxu0 0.0
    %129 = vmatprep.subr.mxu0 0.0
    %130 = vmatpush1.msra.mxu0 0.0
    %131 = vmatprep.subr.mxu0 0.0
    %132 = vmatpush1.msra.mxu0 0.0
    %133 = vmatprep.subr.mxu0 0.0
    %134 = vmatpush1.msra.mxu0 0.0
    %135 = vmatprep.subr.mxu0 0.0
    %136 = vmatpush1.msra.mxu0 0.0
    %137 = vmatprep.subr.mxu0 0.0
    %138 = vmatpush1.msra.mxu0 %v103
    %139 = vmatprep.subr.mxu0 0.0
    %140 = vmatpush1.msra.mxu0 %v102
    %141 = vmatprep.subr.mxu0 0.0
    %142 = vmatpush1.msra.mxu0 %v101
    %143 = vmatprep.subr.mxu0 0.0
    %144 = vmatpush1.msra.mxu0 %v100
    %145 = vmatprep.subr.mxu0 0.0
    %146 = vmatpush2.msra.mxu0 0.0
    %147 = vmatprep.subr.mxu0 0.0
    %148 = vmatpush2.msra.mxu0 0.0
    %149 = vmatprep.subr.mxu0 0.0
    %150 = vmatpush2.msra.mxu0 0.0
    %151 = vmatprep.subr.mxu0 0.0
    %152 = vmatpush2.msra.mxu0 0.0
    %153 = vmatprep.subr.mxu0 0.0
    %154 = vmatpush2.msra.mxu0 0.0
    %155 = vmatprep.subr.mxu0 0.0
    %156 = vmatpush2.msra.mxu0 0.0
    %157 = vmatprep.subr.mxu0 0.0
    %158 = vmatpush2.msra.mxu0 0.0
    %159 = vmatprep.subr.mxu0 0.0
    %160 = vmatpush2.msra.mxu0 0.0
    %161 = vmatprep.subr.mxu0 0.0
    %162 = vmatpush2.msra.mxu0 0.0
    %163 = vmatprep.subr.mxu0 0.0
    %164 = vmatpush2.msra.mxu0 0.0
    %165 = vmatprep.subr.mxu0 0.0
    %166 = vmatpush2.msra.mxu0 0.0
    %167 = vmatprep.subr.mxu0 0.0
    %168 = vmatpush2.msra.mxu0 0.0
    %169 = vmatprep.subr.mxu0 0.0
    %170 = vmatpush2.msra.mxu0 0.0
    %171 = vmatprep.subr.mxu0 0.0
    %172 = vmatpush2.msra.mxu0 0.0
    %173 = vmatprep.subr.mxu0 0.0
    %174 = vmatpush2.msra.mxu0 0.0
    %175 = vmatprep.subr.mxu0 0.0
    %176 = vmatpush2.msra.mxu0 0.0
    %177 = vmatprep.mubr.f32.mxu0 0.0
    %178 = vmatmul.mubr.f32.gmra.mxu0 %v111
    %v179 = vpop.f32.mrf.mxu0
    %v180 = vadd.f32 %v108, %v179
    %v181 = vpop.f32.mrf.mxu0
    %182 = vdwg.mxu0
    %v183 = vmax.f32 %v180, 0.0
    %v184 = vld [vmem:[%s1 + $0x40] sm:$0xff]
    %v185 = vld [vmem:[%s1 + $0x48] sm:$0xff]
    %v186 = vld [vmem:[%s1 + $0x50] sm:$0x1]
    %v187 = vlaneseq
    %v188 = vshrl.u32 %v187, 7
    %v189 = vsub.s32 0, %v188
    %v190 = vrot.slane %v186, %v189
    %v192 = vsel %vm25, %v183, 0
    %194 = vmatprep.subr.mxu0 0.0
    %195 = vmatpush1.msra.mxu0 0.0
    %196 = vmatprep.subr.mxu0 0.0
    %197 = vmatpush1.msra.mxu0 0.0
    %198 = vmatprep.subr.mxu0 0.0
    %199 = vmatpush1.msra.mxu0 0.0
    %200 = vmatprep.subr.mxu0 0.0
    %201 = vmatpush1.msra.mxu0 0.0
    %202 = vmatprep.subr.mxu0 0.0
    %203 = vmatpush1.msra.mxu0 0.0
    %204 = vmatprep.subr.mxu0 0.0
    %205 = vmatpush1.msra.mxu0 0.0
    %206 = vmatprep.subr.mxu0 0.0
    %207 = vmatpush1.msra.mxu0 0.0
    %208 = vmatprep.subr.mxu0 0.0
    %209 = vmatpush1.msra.mxu0 0.0
    %210 = vmatprep.subr.mxu0 0.0
    %211 = vmatpush1.msra.mxu0 0.0
    %212 = vmatprep.subr.mxu0 0.0
    %213 = vmatpush1.msra.mxu0 0.0
    %214 = vmatprep.subr.mxu0 0.0
    %215 = vmatpush1.msra.mxu0 0.0
    %216 = vmatprep.subr.mxu0 0.0
    %217 = vmatpush1.msra.mxu0 0.0
    %218 = vmatprep.subr.mxu0 0.0
    %219 = vmatpush1.msra.mxu0 0.0
    %220 = vmatprep.subr.mxu0 0.0
    %221 = vmatpush1.msra.mxu0 0.0
    %222 = vmatprep.subr.mxu0 0.0
    %223 = vmatpush1.msra.mxu0 %v185
    %224 = vmatprep.subr.mxu0 0.0
    %225 = vmatpush1.msra.mxu0 %v184
    %226 = vmatprep.subr.mxu0 0.0
    %227 = vmatpush2.msra.mxu0 0.0
    %228 = vmatprep.subr.mxu0 0.0
    %229 = vmatpush2.msra.mxu0 0.0
    %230 = vmatprep.subr.mxu0 0.0
    %231 = vmatpush2.msra.mxu0 0.0
    %232 = vmatprep.subr.mxu0 0.0
    %233 = vmatpush2.msra.mxu0 0.0
    %234 = vmatprep.subr.mxu0 0.0
    %235 = vmatpush2.msra.mxu0 0.0
    %236 = vmatprep.subr.mxu0 0.0
    %237 = vmatpush2.msra.mxu0 0.0
    %238 = vmatprep.subr.mxu0 0.0
    %239 = vmatpush2.msra.mxu0 0.0
    %240 = vmatprep.subr.mxu0 0.0
    %241 = vmatpush2.msra.mxu0 0.0
    %242 = vmatprep.subr.mxu0 0.0
    %243 = vmatpush2.msra.mxu0 0.0
    %244 = vmatprep.subr.mxu0 0.0
    %245 = vmatpush2.msra.mxu0 0.0
    %246 = vmatprep.subr.mxu0 0.0
    %247 = vmatpush2.msra.mxu0 0.0
    %248 = vmatprep.subr.mxu0 0.0
    %249 = vmatpush2.msra.mxu0 0.0
    %250 = vmatprep.subr.mxu0 0.0
    %251 = vmatpush2.msra.mxu0 0.0
    %252 = vmatprep.subr.mxu0 0.0
    %253 = vmatpush2.msra.mxu0 0.0
    %254 = vmatprep.subr.mxu0 0.0
    %255 = vmatpush2.msra.mxu0 0.0
    %256 = vmatprep.subr.mxu0 0.0
    %257 = vmatpush2.msra.mxu0 0.0
    %258 = vmatprep.mubr.f32.mxu0 0.0
    %259 = vmatmul.mubr.f32.gmra.mxu0 %v192
    %v260 = vpop.f32.mrf.mxu0
    %v261 = vadd.f32 %v190, %v260
    %v262 = vpop.f32.mrf.mxu0
    %263 = vdwg.mxu0
    %v264 = vld [vmem:[%s1 + $0xf0] sm:$0x7]
    %v265 = vlaneseq
    %v266 = vand.u32 %v265, 127
    %v267 = vld [vmem:[%s1 + $0xd8] sm:$0xff]
    %v268 = vld [vmem:[%s1 + $0xa8] sm:$0xff]
    %v269 = vld [vmem:[%s1 + $0xb0] sm:$0xff]
    %vm270 = vcmask 64512
    %v272 = vsel %vm270, %v261, 0
    %274 = vmatprep.subr.mxu0 0.0
    %275 = vmatpush1.msra.mxu0 0.0
    %276 = vmatprep.subr.mxu0 0.0
    %277 = vmatpush1.msra.mxu0 0.0
    %278 = vmatprep.subr.mxu0 0.0
    %279 = vmatpush1.msra.mxu0 0.0
    %280 = vmatprep.subr.mxu0 0.0
    %281 = vmatpush1.msra.mxu0 0.0
    %282 = vmatprep.subr.mxu0 0.0
    %283 = vmatpush1.msra.mxu0 0.0
    %284 = vmatprep.subr.mxu0 0.0
    %285 = vmatpush1.msra.mxu0 0.0
    %286 = vmatprep.subr.mxu0 0.0
    %287 = vmatpush1.msra.mxu0 0.0
    %288 = vmatprep.subr.mxu0 0.0
    %289 = vmatpush1.msra.mxu0 0.0
    %290 = vmatprep.subr.mxu0 0.0
    %291 = vmatpush1.msra.mxu0 0.0
    %292 = vmatprep.subr.mxu0 0.0
    %293 = vmatpush1.msra.mxu0 0.0
    %294 = vmatprep.subr.mxu0 0.0
    %295 = vmatpush1.msra.mxu0 0.0
    %296 = vmatprep.subr.mxu0 0.0
    %297 = vmatpush1.msra.mxu0 0.0
    %298 = vmatprep.subr.mxu0 0.0
    %299 = vmatpush1.msra.mxu0 0.0
    %300 = vmatprep.subr.mxu0 0.0
    %301 = vmatpush1.msra.mxu0 0.0
    %302 = vmatprep.subr.mxu0 0.0
    %303 = vmatpush1.msra.mxu0 0.0
    %304 = vmatprep.subr.mxu0 0.0
    %305 = vmatpush1.msra.mxu0 %v267
    %306 = vmatprep.subr.mxu0 0.0
    %307 = vmatpush2.msra.mxu0 0.0
    %308 = vmatprep.subr.mxu0 0.0
    %309 = vmatpush2.msra.mxu0 0.0
    %310 = vmatprep.subr.mxu0 0.0
    %311 = vmatpush2.msra.mxu0 0.0
    %312 = vmatprep.subr.mxu0 0.0
    %313 = vmatpush2.msra.mxu0 0.0
    %314 = vmatprep.subr.mxu0 0.0
    %315 = vmatpush2.msra.mxu0 0.0
    %316 = vmatprep.subr.mxu0 0.0
    %317 = vmatpush2.msra.mxu0 0.0
    %318 = vmatprep.subr.mxu0 0.0
    %319 = vmatpush2.msra.mxu0 0.0
    %320 = vmatprep.subr.mxu0 0.0
    %321 = vmatpush2.msra.mxu0 0.0
    %322 = vmatprep.subr.mxu0 0.0
    %323 = vmatpush2.msra.mxu0 0.0
    %324 = vmatprep.subr.mxu0 0.0
    %325 = vmatpush2.msra.mxu0 0.0
    %326 = vmatprep.subr.mxu0 0.0
    %327 = vmatpush2.msra.mxu0 0.0
    %328 = vmatprep.subr.mxu0 0.0
    %329 = vmatpush2.msra.mxu0 0.0
    %330 = vmatprep.subr.mxu0 0.0
    %331 = vmatpush2.msra.mxu0 0.0
    %332 = vmatprep.subr.mxu0 0.0
    %333 = vmatpush2.msra.mxu0 0.0
    %334 = vmatprep.subr.mxu0 0.0
    %335 = vmatpush2.msra.mxu0 0.0
    %336 = vmatprep.subr.mxu0 0.0
    %337 = vmatpush2.msra.mxu0 0.0
    %338 = vmatprep.mubr.f32.mxu0 0.0
    %339 = vmatmul.mubr.f32.gmra.mxu0 %v272
    %v340 = vpop.f32.mrf.mxu0
    %v341 = vadd.f32 0.0, %v340
    %v342 = vpop.f32.mrf.mxu0
    %343 = vdwg.mxu0
    %v344 = vmul.f32 %v341, 2.0
    %v345 = vlaneseq
    %v346 = vshrl.u32 %v345, 7
    %v347 = vsub.s32 0, %v346
    %v348 = vrot.slane %v264, %v347
    %v349 = vsub.f32 %v348, %v344
    %v350 = vsel %vm25, %v349, inf
    %351 = vmin.xlane.f32.xlu0 %v350
    %v352 = vpop.xlane.xlu0 %351
    %vm353 = vcmp.eq.f32.partialorder %v349, %v352
    %v354 = vsel %vm353, %v266, 16
    %v355 = vsel %vm25, %v354, 2147483647
    %v356 = vand.u32 %v355, 65535
    %v357 = vshra.s32 %v355, 16
    %v358 = vcvt.s32.f32 %v356
    %v359 = vcvt.s32.f32 %v357
    %360 = vmin.xlane.f32.xlu0 %v359
    %v361 = vpop.xlane.xlu0 %360
    %vm362 = vcmp.eq.f32.partialorder %v359, %v361
    %v363 = vsel %vm362, %v358, inf
    %364 = vmin.xlane.f32.xlu0 %v363
    %v365 = vpop.xlane.xlu0 %364
    %v366 = vcvt.f32.s32 %v365
    %v367 = vcvt.f32.s32 %v361
    %v368 = vshll.u32 %v367, 16
    %v369 = vadd.s32 %v368, %v366
    %vm370 = vcmp.eq.s32.totalorder %v266, %v369
    %v371 = vsel %vm370, 1, 0
    %v372 = vcvt.s32.f32 %v371
    %v374 = vsel %vm25, %v372, 0
    %376 = vmatprep.subr.mxu0 0.0
    %377 = vmatpush1.msra.mxu0 0.0
    %378 = vmatprep.subr.mxu0 0.0
    %379 = vmatpush1.msra.mxu0 0.0
    %380 = vmatprep.subr.mxu0 0.0
    %381 = vmatpush1.msra.mxu0 0.0
    %382 = vmatprep.subr.mxu0 0.0
    %383 = vmatpush1.msra.mxu0 0.0
    %384 = vmatprep.subr.mxu0 0.0
    %385 = vmatpush1.msra.mxu0 0.0
    %386 = vmatprep.subr.mxu0 0.0
    %387 = vmatpush1.msra.mxu0 0.0
    %388 = vmatprep.subr.mxu0 0.0
    %389 = vmatpush1.msra.mxu0 0.0
    %390 = vmatprep.subr.mxu0 0.0
    %391 = vmatpush1.msra.mxu0 0.0
    %392 = vmatprep.subr.mxu0 0.0
    %393 = vmatpush1.msra.mxu0 0.0
    %394 = vmatprep.subr.mxu0 0.0
    %395 = vmatpush1.msra.mxu0 0.0
    %396 = vmatprep.subr.mxu0 0.0
    %397 = vmatpush1.msra.mxu0 0.0
    %398 = vmatprep.subr.mxu0 0.0
    %399 = vmatpush1.msra.mxu0 0.0
    %400 = vmatprep.subr.mxu0 0.0
    %401 = vmatpush1.msra.mxu0 0.0
    %402 = vmatprep.subr.mxu0 0.0
    %403 = vmatpush1.msra.mxu0 0.0
    %404 = vmatprep.subr.mxu0 0.0
    %405 = vmatpush1.msra.mxu0 %v269
    %406 = vmatprep.subr.mxu0 0.0
    %407 = vmatpush1.msra.mxu0 %v268
    %408 = vmatprep.subr.mxu0 0.0
    %409 = vmatpush2.msra.mxu0 0.0
    %410 = vmatprep.subr.mxu0 0.0
    %411 = vmatpush2.msra.mxu0 0.0
    %412 = vmatprep.subr.mxu0 0.0
    %413 = vmatpush2.msra.mxu0 0.0
    %414 = vmatprep.subr.mxu0 0.0
    %415 = vmatpush2.msra.mxu0 0.0
    %416 = vmatprep.subr.mxu0 0.0
    %417 = vmatpush2.msra.mxu0 0.0
    %418 = vmatprep.subr.mxu0 0.0
    %419 = vmatpush2.msra.mxu0 0.0
    %420 = vmatprep.subr.mxu0 0.0
    %421 = vmatpush2.msra.mxu0 0.0
    %422 = vmatprep.subr.mxu0 0.0
    %423 = vmatpush2.msra.mxu0 0.0
    %424 = vmatprep.subr.mxu0 0.0
    %425 = vmatpush2.msra.mxu0 0.0
    %426 = vmatprep.subr.mxu0 0.0
    %427 = vmatpush2.msra.mxu0 0.0
    %428 = vmatprep.subr.mxu0 0.0
    %429 = vmatpush2.msra.mxu0 0.0
    %430 = vmatprep.subr.mxu0 0.0
    %431 = vmatpush2.msra.mxu0 0.0
    %432 = vmatprep.subr.mxu0 0.0
    %433 = vmatpush2.msra.mxu0 0.0
    %434 = vmatprep.subr.mxu0 0.0
    %435 = vmatpush2.msra.mxu0 0.0
    %436 = vmatprep.subr.mxu0 0.0
    %437 = vmatpush2.msra.mxu0 0.0
    %438 = vmatprep.subr.mxu0 0.0
    %439 = vmatpush2.msra.mxu0 0.0
    %440 = vmatprep.mubr.f32.mxu0 0.0
    %441 = vmatmul.mubr.f32.gmra.mxu0 %v374
    %v442 = vpop.f32.mrf.mxu0
    %v443 = vadd.f32 0.0, %v442
    %v444 = vpop.f32.mrf.mxu0
    %445 = vdwg.mxu0
    %v446 = vsub.f32 %v261, %v443
    %v447 = vmul.f32 %v446, %v446
    %v448 = vadd.f32 %v447, 0.0
    %v449 = vsel %vm25, %v372, 0.0
    %v450 = vrot.slane %v449, 4
    %v451 = vadd.f32 %v449, %v450
    %v452 = vrot.slane %v451, 2
    %v453 = vadd.f32 %v451, %v452
    %v454 = vrot.slane %v453, 1
    %v455 = vadd.f32 %v453, %v454
    %vm456 = vcmp.lt.f32.partialorder %v455, 1.0
    %v457 = vsel %vm456, 1, 0
    %v458 = vcvt.s32.f32 %v457
    %v459 = vadd.f32 %v458, 0.0
    %v460 = vadd.f32 %v443, 0.0
    %v461 = vld [vmem:[%s1 + $0xe0] sm:$0xff]
    %v462 = vld [vmem:[%s1 + $0xb8] sm:$0xff]
    %v463 = vld [vmem:[%s1 + $0xc0] sm:$0xff]
    %v465 = vsel %vm270, %v446, 0
    %467 = vmatprep.subr.mxu0 0.0
    %468 = vmatpush1.msra.mxu0 0.0
    %469 = vmatprep.subr.mxu0 0.0
    %470 = vmatpush1.msra.mxu0 0.0
    %471 = vmatprep.subr.mxu0 0.0
    %472 = vmatpush1.msra.mxu0 0.0
    %473 = vmatprep.subr.mxu0 0.0
    %474 = vmatpush1.msra.mxu0 0.0
    %475 = vmatprep.subr.mxu0 0.0
    %476 = vmatpush1.msra.mxu0 0.0
    %477 = vmatprep.subr.mxu0 0.0
    %478 = vmatpush1.msra.mxu0 0.0
    %479 = vmatprep.subr.mxu0 0.0
    %480 = vmatpush1.msra.mxu0 0.0
    %481 = vmatprep.subr.mxu0 0.0
    %482 = vmatpush1.msra.mxu0 0.0
    %483 = vmatprep.subr.mxu0 0.0
    %484 = vmatpush1.msra.mxu0 0.0
    %485 = vmatprep.subr.mxu0 0.0
    %486 = vmatpush1.msra.mxu0 0.0
    %487 = vmatprep.subr.mxu0 0.0
    %488 = vmatpush1.msra.mxu0 0.0
    %489 = vmatprep.subr.mxu0 0.0
    %490 = vmatpush1.msra.mxu0 0.0
    %491 = vmatprep.subr.mxu0 0.0
    %492 = vmatpush1.msra.mxu0 0.0
    %493 = vmatprep.subr.mxu0 0.0
    %494 = vmatpush1.msra.mxu0 0.0
    %495 = vmatprep.subr.mxu0 0.0
    %496 = vmatpush1.msra.mxu0 0.0
    %497 = vmatprep.subr.mxu0 0.0
    %498 = vmatpush1.msra.mxu0 %v461
    %499 = vmatprep.subr.mxu0 0.0
    %500 = vmatpush2.msra.mxu0 0.0
    %501 = vmatprep.subr.mxu0 0.0
    %502 = vmatpush2.msra.mxu0 0.0
    %503 = vmatprep.subr.mxu0 0.0
    %504 = vmatpush2.msra.mxu0 0.0
    %505 = vmatprep.subr.mxu0 0.0
    %506 = vmatpush2.msra.mxu0 0.0
    %507 = vmatprep.subr.mxu0 0.0
    %508 = vmatpush2.msra.mxu0 0.0
    %509 = vmatprep.subr.mxu0 0.0
    %510 = vmatpush2.msra.mxu0 0.0
    %511 = vmatprep.subr.mxu0 0.0
    %512 = vmatpush2.msra.mxu0 0.0
    %513 = vmatprep.subr.mxu0 0.0
    %514 = vmatpush2.msra.mxu0 0.0
    %515 = vmatprep.subr.mxu0 0.0
    %516 = vmatpush2.msra.mxu0 0.0
    %517 = vmatprep.subr.mxu0 0.0
    %518 = vmatpush2.msra.mxu0 0.0
    %519 = vmatprep.subr.mxu0 0.0
    %520 = vmatpush2.msra.mxu0 0.0
    %521 = vmatprep.subr.mxu0 0.0
    %522 = vmatpush2.msra.mxu0 0.0
    %523 = vmatprep.subr.mxu0 0.0
    %524 = vmatpush2.msra.mxu0 0.0
    %525 = vmatprep.subr.mxu0 0.0
    %526 = vmatpush2.msra.mxu0 0.0
    %527 = vmatprep.subr.mxu0 0.0
    %528 = vmatpush2.msra.mxu0 0.0
    %529 = vmatprep.subr.mxu0 0.0
    %530 = vmatpush2.msra.mxu0 0.0
    %531 = vmatprep.mubr.f32.mxu0 0.0
    %532 = vmatmul.mubr.f32.gmra.mxu0 %v465
    %v533 = vpop.f32.mrf.mxu0
    %v534 = vadd.f32 0.0, %v533
    %v535 = vpop.f32.mrf.mxu0
    %536 = vdwg.mxu0
    %v537 = vmul.f32 %v534, 2.0
    %v538 = vlaneseq
    %v539 = vshrl.u32 %v538, 7
    %v540 = vsub.s32 1, %v539
    %v541 = vrot.slane %v264, %v540
    %v542 = vsub.f32 %v541, %v537
    %v543 = vsel %vm25, %v542, inf
    %544 = vmin.xlane.f32.xlu0 %v543
    %v545 = vpop.xlane.xlu0 %544
    %vm546 = vcmp.eq.f32.partialorder %v542, %v545
    %v547 = vsel %vm546, %v266, 16
    %v548 = vsel %vm25, %v547, 2147483647
    %v549 = vand.u32 %v548, 65535
    %v550 = vshra.s32 %v548, 16
    %v551 = vcvt.s32.f32 %v549
    %v552 = vcvt.s32.f32 %v550
    %553 = vmin.xlane.f32.xlu0 %v552
    %v554 = vpop.xlane.xlu0 %553
    %vm555 = vcmp.eq.f32.partialorder %v552, %v554
    %v556 = vsel %vm555, %v551, inf
    %557 = vmin.xlane.f32.xlu0 %v556
    %v558 = vpop.xlane.xlu0 %557
    %v559 = vcvt.f32.s32 %v558
    %v560 = vcvt.f32.s32 %v554
    %v561 = vshll.u32 %v560, 16
    %v562 = vadd.s32 %v561, %v559
    %vm563 = vcmp.eq.s32.totalorder %v266, %v562
    %v564 = vsel %vm563, 1, 0
    %v565 = vcvt.s32.f32 %v564
    %v567 = vsel %vm25, %v565, 0
    %569 = vmatprep.subr.mxu0 0.0
    %570 = vmatpush1.msra.mxu0 0.0
    %571 = vmatprep.subr.mxu0 0.0
    %572 = vmatpush1.msra.mxu0 0.0
    %573 = vmatprep.subr.mxu0 0.0
    %574 = vmatpush1.msra.mxu0 0.0
    %575 = vmatprep.subr.mxu0 0.0
    %576 = vmatpush1.msra.mxu0 0.0
    %577 = vmatprep.subr.mxu0 0.0
    %578 = vmatpush1.msra.mxu0 0.0
    %579 = vmatprep.subr.mxu0 0.0
    %580 = vmatpush1.msra.mxu0 0.0
    %581 = vmatprep.subr.mxu0 0.0
    %582 = vmatpush1.msra.mxu0 0.0
    %583 = vmatprep.subr.mxu0 0.0
    %584 = vmatpush1.msra.mxu0 0.0
    %585 = vmatprep.subr.mxu0 0.0
    %586 = vmatpush1.msra.mxu0 0.0
    %587 = vmatprep.subr.mxu0 0.0
    %588 = vmatpush1.msra.mxu0 0.0
    %589 = vmatprep.subr.mxu0 0.0
    %590 = vmatpush1.msra.mxu0 0.0
    %591 = vmatprep.subr.mxu0 0.0
    %592 = vmatpush1.msra.mxu0 0.0
    %593 = vmatprep.subr.mxu0 0.0
    %594 = vmatpush1.msra.mxu0 0.0
    %595 = vmatprep.subr.mxu0 0.0
    %596 = vmatpush1.msra.mxu0 0.0
    %597 = vmatprep.subr.mxu0 0.0
    %598 = vmatpush1.msra.mxu0 %v463
    %599 = vmatprep.subr.mxu0 0.0
    %600 = vmatpush1.msra.mxu0 %v462
    %601 = vmatprep.subr.mxu0 0.0
    %602 = vmatpush2.msra.mxu0 0.0
    %603 = vmatprep.subr.mxu0 0.0
    %604 = vmatpush2.msra.mxu0 0.0
    %605 = vmatprep.subr.mxu0 0.0
    %606 = vmatpush2.msra.mxu0 0.0
    %607 = vmatprep.subr.mxu0 0.0
    %608 = vmatpush2.msra.mxu0 0.0
    %609 = vmatprep.subr.mxu0 0.0
    %610 = vmatpush2.msra.mxu0 0.0
    %611 = vmatprep.subr.mxu0 0.0
    %612 = vmatpush2.msra.mxu0 0.0
    %613 = vmatprep.subr.mxu0 0.0
    %614 = vmatpush2.msra.mxu0 0.0
    %615 = vmatprep.subr.mxu0 0.0
    %616 = vmatpush2.msra.mxu0 0.0
    %617 = vmatprep.subr.mxu0 0.0
    %618 = vmatpush2.msra.mxu0 0.0
    %619 = vmatprep.subr.mxu0 0.0
    %620 = vmatpush2.msra.mxu0 0.0
    %621 = vmatprep.subr.mxu0 0.0
    %622 = vmatpush2.msra.mxu0 0.0
    %623 = vmatprep.subr.mxu0 0.0
    %624 = vmatpush2.msra.mxu0 0.0
    %625 = vmatprep.subr.mxu0 0.0
    %626 = vmatpush2.msra.mxu0 0.0
    %627 = vmatprep.subr.mxu0 0.0
    %628 = vmatpush2.msra.mxu0 0.0
    %629 = vmatprep.subr.mxu0 0.0
    %630 = vmatpush2.msra.mxu0 0.0
    %631 = vmatprep.subr.mxu0 0.0
    %632 = vmatpush2.msra.mxu0 0.0
    %633 = vmatprep.mubr.f32.mxu0 0.0
    %634 = vmatmul.mubr.f32.gmra.mxu0 %v567
    %v635 = vpop.f32.mrf.mxu0
    %v636 = vadd.f32 0.0, %v635
    %v637 = vpop.f32.mrf.mxu0
    %638 = vdwg.mxu0
    %v639 = vsub.f32 %v446, %v636
    %v640 = vmul.f32 %v639, %v639
    %v641 = vadd.f32 %v448, %v640
    %v642 = vsel %vm25, %v565, 0.0
    %v643 = vrot.slane %v642, 4
    %v644 = vadd.f32 %v642, %v643
    %v645 = vrot.slane %v644, 2
    %v646 = vadd.f32 %v644, %v645
    %v647 = vrot.slane %v646, 1
    %v648 = vadd.f32 %v646, %v647
    %vm649 = vcmp.lt.f32.partialorder %v648, 1.0
    %v650 = vsel %vm649, 1, 0
    %v651 = vcvt.s32.f32 %v650
    %v652 = vadd.f32 %v459, %v651
    %v653 = vadd.f32 %v460, %v636
    %v654 = vld [vmem:[%s1 + $0xe8] sm:$0xff]
    %v655 = vld [vmem:[%s1 + $0xc8] sm:$0xff]
    %v656 = vld [vmem:[%s1 + $0xd0] sm:$0xff]
    %v658 = vsel %vm270, %v639, 0
    %660 = vmatprep.subr.mxu0 0.0
    %661 = vmatpush1.msra.mxu0 0.0
    %662 = vmatprep.subr.mxu0 0.0
    %663 = vmatpush1.msra.mxu0 0.0
    %664 = vmatprep.subr.mxu0 0.0
    %665 = vmatpush1.msra.mxu0 0.0
    %666 = vmatprep.subr.mxu0 0.0
    %667 = vmatpush1.msra.mxu0 0.0
    %668 = vmatprep.subr.mxu0 0.0
    %669 = vmatpush1.msra.mxu0 0.0
    %670 = vmatprep.subr.mxu0 0.0
    %671 = vmatpush1.msra.mxu0 0.0
    %672 = vmatprep.subr.mxu0 0.0
    %673 = vmatpush1.msra.mxu0 0.0
    %674 = vmatprep.subr.mxu0 0.0
    %675 = vmatpush1.msra.mxu0 0.0
    %676 = vmatprep.subr.mxu0 0.0
    %677 = vmatpush1.msra.mxu0 0.0
    %678 = vmatprep.subr.mxu0 0.0
    %679 = vmatpush1.msra.mxu0 0.0
    %680 = vmatprep.subr.mxu0 0.0
    %681 = vmatpush1.msra.mxu0 0.0
    %682 = vmatprep.subr.mxu0 0.0
    %683 = vmatpush1.msra.mxu0 0.0
    %684 = vmatprep.subr.mxu0 0.0
    %685 = vmatpush1.msra.mxu0 0.0
    %686 = vmatprep.subr.mxu0 0.0
    %687 = vmatpush1.msra.mxu0 0.0
    %688 = vmatprep.subr.mxu0 0.0
    %689 = vmatpush1.msra.mxu0 0.0
    %690 = vmatprep.subr.mxu0 0.0
    %691 = vmatpush1.msra.mxu0 %v654
    %692 = vmatprep.subr.mxu0 0.0
    %693 = vmatpush2.msra.mxu0 0.0
    %694 = vmatprep.subr.mxu0 0.0
    %695 = vmatpush2.msra.mxu0 0.0
    %696 = vmatprep.subr.mxu0 0.0
    %697 = vmatpush2.msra.mxu0 0.0
    %698 = vmatprep.subr.mxu0 0.0
    %699 = vmatpush2.msra.mxu0 0.0
    %700 = vmatprep.subr.mxu0 0.0
    %701 = vmatpush2.msra.mxu0 0.0
    %702 = vmatprep.subr.mxu0 0.0
    %703 = vmatpush2.msra.mxu0 0.0
    %704 = vmatprep.subr.mxu0 0.0
    %705 = vmatpush2.msra.mxu0 0.0
    %706 = vmatprep.subr.mxu0 0.0
    %707 = vmatpush2.msra.mxu0 0.0
    %708 = vmatprep.subr.mxu0 0.0
    %709 = vmatpush2.msra.mxu0 0.0
    %710 = vmatprep.subr.mxu0 0.0
    %711 = vmatpush2.msra.mxu0 0.0
    %712 = vmatprep.subr.mxu0 0.0
    %713 = vmatpush2.msra.mxu0 0.0
    %714 = vmatprep.subr.mxu0 0.0
    %715 = vmatpush2.msra.mxu0 0.0
    %716 = vmatprep.subr.mxu0 0.0
    %717 = vmatpush2.msra.mxu0 0.0
    %718 = vmatprep.subr.mxu0 0.0
    %719 = vmatpush2.msra.mxu0 0.0
    %720 = vmatprep.subr.mxu0 0.0
    %721 = vmatpush2.msra.mxu0 0.0
    %722 = vmatprep.subr.mxu0 0.0
    %723 = vmatpush2.msra.mxu0 0.0
    %724 = vmatprep.mubr.f32.mxu0 0.0
    %725 = vmatmul.mubr.f32.gmra.mxu0 %v658
    %v726 = vpop.f32.mrf.mxu0
    %v727 = vadd.f32 0.0, %v726
    %v728 = vpop.f32.mrf.mxu0
    %729 = vdwg.mxu0
    %v730 = vmul.f32 %v727, 2.0
    %v731 = vlaneseq
    %v732 = vshrl.u32 %v731, 7
    %v733 = vsub.s32 2, %v732
    %v734 = vrot.slane %v264, %v733
    %v735 = vsub.f32 %v734, %v730
    %v736 = vsel %vm25, %v735, inf
    %737 = vmin.xlane.f32.xlu0 %v736
    %v738 = vpop.xlane.xlu0 %737
    %vm739 = vcmp.eq.f32.partialorder %v735, %v738
    %v740 = vsel %vm739, %v266, 16
    %v741 = vsel %vm25, %v740, 2147483647
    %v742 = vand.u32 %v741, 65535
    %v743 = vshra.s32 %v741, 16
    %v744 = vcvt.s32.f32 %v742
    %v745 = vcvt.s32.f32 %v743
    %746 = vmin.xlane.f32.xlu0 %v745
    %v747 = vpop.xlane.xlu0 %746
    %vm748 = vcmp.eq.f32.partialorder %v745, %v747
    %v749 = vsel %vm748, %v744, inf
    %750 = vmin.xlane.f32.xlu0 %v749
    %v751 = vpop.xlane.xlu0 %750
    %v752 = vcvt.f32.s32 %v751
    %v753 = vcvt.f32.s32 %v747
    %v754 = vshll.u32 %v753, 16
    %v755 = vadd.s32 %v754, %v752
    %vm756 = vcmp.eq.s32.totalorder %v266, %v755
    %v757 = vsel %vm756, 1, 0
    %v758 = vcvt.s32.f32 %v757
    %v760 = vsel %vm25, %v758, 0
    %762 = vmatprep.subr.mxu0 0.0
    %763 = vmatpush1.msra.mxu0 0.0
    %764 = vmatprep.subr.mxu0 0.0
    %765 = vmatpush1.msra.mxu0 0.0
    %766 = vmatprep.subr.mxu0 0.0
    %767 = vmatpush1.msra.mxu0 0.0
    %768 = vmatprep.subr.mxu0 0.0
    %769 = vmatpush1.msra.mxu0 0.0
    %770 = vmatprep.subr.mxu0 0.0
    %771 = vmatpush1.msra.mxu0 0.0
    %772 = vmatprep.subr.mxu0 0.0
    %773 = vmatpush1.msra.mxu0 0.0
    %774 = vmatprep.subr.mxu0 0.0
    %775 = vmatpush1.msra.mxu0 0.0
    %776 = vmatprep.subr.mxu0 0.0
    %777 = vmatpush1.msra.mxu0 0.0
    %778 = vmatprep.subr.mxu0 0.0
    %779 = vmatpush1.msra.mxu0 0.0
    %780 = vmatprep.subr.mxu0 0.0
    %781 = vmatpush1.msra.mxu0 0.0
    %782 = vmatprep.subr.mxu0 0.0
    %783 = vmatpush1.msra.mxu0 0.0
    %784 = vmatprep.subr.mxu0 0.0
    %785 = vmatpush1.msra.mxu0 0.0
    %786 = vmatprep.subr.mxu0 0.0
    %787 = vmatpush1.msra.mxu0 0.0
    %788 = vmatprep.subr.mxu0 0.0
    %789 = vmatpush1.msra.mxu0 0.0
    %790 = vmatprep.subr.mxu0 0.0
    %791 = vmatpush1.msra.mxu0 %v656
    %792 = vmatprep.subr.mxu0 0.0
    %793 = vmatpush1.msra.mxu0 %v655
    %794 = vmatprep.subr.mxu0 0.0
    %795 = vmatpush2.msra.mxu0 0.0
    %796 = vmatprep.subr.mxu0 0.0
    %797 = vmatpush2.msra.mxu0 0.0
    %798 = vmatprep.subr.mxu0 0.0
    %799 = vmatpush2.msra.mxu0 0.0
    %800 = vmatprep.subr.mxu0 0.0
    %801 = vmatpush2.msra.mxu0 0.0
    %802 = vmatprep.subr.mxu0 0.0
    %803 = vmatpush2.msra.mxu0 0.0
    %804 = vmatprep.subr.mxu0 0.0
    %805 = vmatpush2.msra.mxu0 0.0
    %806 = vmatprep.subr.mxu0 0.0
    %807 = vmatpush2.msra.mxu0 0.0
    %808 = vmatprep.subr.mxu0 0.0
    %809 = vmatpush2.msra.mxu0 0.0
    %810 = vmatprep.subr.mxu0 0.0
    %811 = vmatpush2.msra.mxu0 0.0
    %812 = vmatprep.subr.mxu0 0.0
    %813 = vmatpush2.msra.mxu0 0.0
    %814 = vmatprep.subr.mxu0 0.0
    %815 = vmatpush2.msra.mxu0 0.0
    %816 = vmatprep.subr.mxu0 0.0
    %817 = vmatpush2.msra.mxu0 0.0
    %818 = vmatprep.subr.mxu0 0.0
    %819 = vmatpush2.msra.mxu0 0.0
    %820 = vmatprep.subr.mxu0 0.0
    %821 = vmatpush2.msra.mxu0 0.0
    %822 = vmatprep.subr.mxu0 0.0
    %823 = vmatpush2.msra.mxu0 0.0
    %824 = vmatprep.subr.mxu0 0.0
    %825 = vmatpush2.msra.mxu0 0.0
    %826 = vmatprep.mubr.f32.mxu0 0.0
    %827 = vmatmul.mubr.f32.gmra.mxu0 %v760
    %v828 = vpop.f32.mrf.mxu0
    %v829 = vadd.f32 0.0, %v828
    %v830 = vpop.f32.mrf.mxu0
    %831 = vdwg.mxu0
    %v832 = vsub.f32 %v639, %v829
    %v833 = vmul.f32 %v832, %v832
    %v834 = vadd.f32 %v641, %v833
    %v835 = vsel %vm25, %v758, 0.0
    %v836 = vrot.slane %v835, 4
    %v837 = vadd.f32 %v835, %v836
    %v838 = vrot.slane %v837, 2
    %v839 = vadd.f32 %v837, %v838
    %v840 = vrot.slane %v839, 1
    %v841 = vadd.f32 %v839, %v840
    %vm842 = vcmp.lt.f32.partialorder %v841, 1.0
    %v843 = vsel %vm842, 1, 0
    %v844 = vcvt.s32.f32 %v843
    %v845 = vadd.f32 %v652, %v844
    %v846 = vadd.f32 %v653, %v829
    %v847 = vld [vmem:[%s1 + $0x58] sm:$0xff]
    %v848 = vld [vmem:[%s1 + $0x60] sm:$0x1]
    %v849 = vlaneseq
    %v850 = vshrl.u32 %v849, 7
    %v851 = vsub.s32 0, %v850
    %v852 = vrot.slane %v848, %v851
    %v854 = vsel %vm270, %v846, 0
    %856 = vmatprep.subr.mxu0 0.0
    %857 = vmatpush1.msra.mxu0 0.0
    %858 = vmatprep.subr.mxu0 0.0
    %859 = vmatpush1.msra.mxu0 0.0
    %860 = vmatprep.subr.mxu0 0.0
    %861 = vmatpush1.msra.mxu0 0.0
    %862 = vmatprep.subr.mxu0 0.0
    %863 = vmatpush1.msra.mxu0 0.0
    %864 = vmatprep.subr.mxu0 0.0
    %865 = vmatpush1.msra.mxu0 0.0
    %866 = vmatprep.subr.mxu0 0.0
    %867 = vmatpush1.msra.mxu0 0.0
    %868 = vmatprep.subr.mxu0 0.0
    %869 = vmatpush1.msra.mxu0 0.0
    %870 = vmatprep.subr.mxu0 0.0
    %871 = vmatpush1.msra.mxu0 0.0
    %872 = vmatprep.subr.mxu0 0.0
    %873 = vmatpush1.msra.mxu0 0.0
    %874 = vmatprep.subr.mxu0 0.0
    %875 = vmatpush1.msra.mxu0 0.0
    %876 = vmatprep.subr.mxu0 0.0
    %877 = vmatpush1.msra.mxu0 0.0
    %878 = vmatprep.subr.mxu0 0.0
    %879 = vmatpush1.msra.mxu0 0.0
    %880 = vmatprep.subr.mxu0 0.0
    %881 = vmatpush1.msra.mxu0 0.0
    %882 = vmatprep.subr.mxu0 0.0
    %883 = vmatpush1.msra.mxu0 0.0
    %884 = vmatprep.subr.mxu0 0.0
    %885 = vmatpush1.msra.mxu0 0.0
    %886 = vmatprep.subr.mxu0 0.0
    %887 = vmatpush1.msra.mxu0 %v847
    %888 = vmatprep.subr.mxu0 0.0
    %889 = vmatpush2.msra.mxu0 0.0
    %890 = vmatprep.subr.mxu0 0.0
    %891 = vmatpush2.msra.mxu0 0.0
    %892 = vmatprep.subr.mxu0 0.0
    %893 = vmatpush2.msra.mxu0 0.0
    %894 = vmatprep.subr.mxu0 0.0
    %895 = vmatpush2.msra.mxu0 0.0
    %896 = vmatprep.subr.mxu0 0.0
    %897 = vmatpush2.msra.mxu0 0.0
    %898 = vmatprep.subr.mxu0 0.0
    %899 = vmatpush2.msra.mxu0 0.0
    %900 = vmatprep.subr.mxu0 0.0
    %901 = vmatpush2.msra.mxu0 0.0
    %902 = vmatprep.subr.mxu0 0.0
    %903 = vmatpush2.msra.mxu0 0.0
    %904 = vmatprep.subr.mxu0 0.0
    %905 = vmatpush2.msra.mxu0 0.0
    %906 = vmatprep.subr.mxu0 0.0
    %907 = vmatpush2.msra.mxu0 0.0
    %908 = vmatprep.subr.mxu0 0.0
    %909 = vmatpush2.msra.mxu0 0.0
    %910 = vmatprep.subr.mxu0 0.0
    %911 = vmatpush2.msra.mxu0 0.0
    %912 = vmatprep.subr.mxu0 0.0
    %913 = vmatpush2.msra.mxu0 0.0
    %914 = vmatprep.subr.mxu0 0.0
    %915 = vmatpush2.msra.mxu0 0.0
    %916 = vmatprep.subr.mxu0 0.0
    %917 = vmatpush2.msra.mxu0 0.0
    %918 = vmatprep.subr.mxu0 0.0
    %919 = vmatpush2.msra.mxu0 0.0
    %920 = vmatprep.mubr.f32.mxu0 0.0
    %921 = vmatmul.mubr.f32.gmra.mxu0 %v854
    %v922 = vpop.f32.mrf.mxu0
    %v923 = vadd.f32 %v852, %v922
    %v924 = vpop.f32.mrf.mxu0
    %925 = vdwg.mxu0
    %v926 = vmax.f32 %v923, 0.0
    %v927 = vld [vmem:[%s1 + $0x68] sm:$0xff]
    %v928 = vld [vmem:[%s1 + $0x70] sm:$0xff]
    %v929 = vld [vmem:[%s1 + $0x78] sm:$0x1]
    %v930 = vlaneseq
    %v931 = vshrl.u32 %v930, 7
    %v932 = vsub.s32 0, %v931
    %v933 = vrot.slane %v929, %v932
    %v935 = vsel %vm25, %v926, 0
    %937 = vmatprep.subr.mxu0 0.0
    %938 = vmatpush1.msra.mxu0 0.0
    %939 = vmatprep.subr.mxu0 0.0
    %940 = vmatpush1.msra.mxu0 0.0
    %941 = vmatprep.subr.mxu0 0.0
    %942 = vmatpush1.msra.mxu0 0.0
    %943 = vmatprep.subr.mxu0 0.0
    %944 = vmatpush1.msra.mxu0 0.0
    %945 = vmatprep.subr.mxu0 0.0
    %946 = vmatpush1.msra.mxu0 0.0
    %947 = vmatprep.subr.mxu0 0.0
    %948 = vmatpush1.msra.mxu0 0.0
    %949 = vmatprep.subr.mxu0 0.0
    %950 = vmatpush1.msra.mxu0 0.0
    %951 = vmatprep.subr.mxu0 0.0
    %952 = vmatpush1.msra.mxu0 0.0
    %953 = vmatprep.subr.mxu0 0.0
    %954 = vmatpush1.msra.mxu0 0.0
    %955 = vmatprep.subr.mxu0 0.0
    %956 = vmatpush1.msra.mxu0 0.0
    %957 = vmatprep.subr.mxu0 0.0
    %958 = vmatpush1.msra.mxu0 0.0
    %959 = vmatprep.subr.mxu0 0.0
    %960 = vmatpush1.msra.mxu0 0.0
    %961 = vmatprep.subr.mxu0 0.0
    %962 = vmatpush1.msra.mxu0 0.0
    %963 = vmatprep.subr.mxu0 0.0
    %964 = vmatpush1.msra.mxu0 0.0
    %965 = vmatprep.subr.mxu0 0.0
    %966 = vmatpush1.msra.mxu0 %v928
    %967 = vmatprep.subr.mxu0 0.0
    %968 = vmatpush1.msra.mxu0 %v927
    %969 = vmatprep.subr.mxu0 0.0
    %970 = vmatpush2.msra.mxu0 0.0
    %971 = vmatprep.subr.mxu0 0.0
    %972 = vmatpush2.msra.mxu0 0.0
    %973 = vmatprep.subr.mxu0 0.0
    %974 = vmatpush2.msra.mxu0 0.0
    %975 = vmatprep.subr.mxu0 0.0
    %976 = vmatpush2.msra.mxu0 0.0
    %977 = vmatprep.subr.mxu0 0.0
    %978 = vmatpush2.msra.mxu0 0.0
    %979 = vmatprep.subr.mxu0 0.0
    %980 = vmatpush2.msra.mxu0 0.0
    %981 = vmatprep.subr.mxu0 0.0
    %982 = vmatpush2.msra.mxu0 0.0
    %983 = vmatprep.subr.mxu0 0.0
    %984 = vmatpush2.msra.mxu0 0.0
    %985 = vmatprep.subr.mxu0 0.0
    %986 = vmatpush2.msra.mxu0 0.0
    %987 = vmatprep.subr.mxu0 0.0
    %988 = vmatpush2.msra.mxu0 0.0
    %989 = vmatprep.subr.mxu0 0.0
    %990 = vmatpush2.msra.mxu0 0.0
    %991 = vmatprep.subr.mxu0 0.0
    %992 = vmatpush2.msra.mxu0 0.0
    %993 = vmatprep.subr.mxu0 0.0
    %994 = vmatpush2.msra.mxu0 0.0
    %995 = vmatprep.subr.mxu0 0.0
    %996 = vmatpush2.msra.mxu0 0.0
    %997 = vmatprep.subr.mxu0 0.0
    %998 = vmatpush2.msra.mxu0 0.0
    %999 = vmatprep.subr.mxu0 0.0
    %1000 = vmatpush2.msra.mxu0 0.0
    %1001 = vmatprep.mubr.f32.mxu0 0.0
    %1002 = vmatmul.mubr.f32.gmra.mxu0 %v935
    %v1003 = vpop.f32.mrf.mxu0
    %v1004 = vadd.f32 %v933, %v1003
    %v1005 = vpop.f32.mrf.mxu0
    %1006 = vdwg.mxu0
    %v1007 = vmax.f32 %v1004, 0.0
    %v1008 = vld [vmem:[%s1 + $0x80] sm:$0xff]
    %v1009 = vld [vmem:[%s1 + $0x88] sm:$0xff]
    %v1010 = vld [vmem:[%s1 + $0x90] sm:$0xff]
    %v1011 = vld [vmem:[%s1 + $0x98] sm:$0xff]
    %v1012 = vld [vmem:[%s1 + $0xa0] sm:$0x1]
    %v1013 = vlaneseq
    %v1014 = vshrl.u32 %v1013, 7
    %v1015 = vsub.s32 0, %v1014
    %v1016 = vrot.slane %v1012, %v1015
    %v1018 = vsel %vm109, %v1007, 0
    %1020 = vmatprep.subr.mxu0 0.0
    %1021 = vmatpush1.msra.mxu0 0.0
    %1022 = vmatprep.subr.mxu0 0.0
    %1023 = vmatpush1.msra.mxu0 0.0
    %1024 = vmatprep.subr.mxu0 0.0
    %1025 = vmatpush1.msra.mxu0 0.0
    %1026 = vmatprep.subr.mxu0 0.0
    %1027 = vmatpush1.msra.mxu0 0.0
    %1028 = vmatprep.subr.mxu0 0.0
    %1029 = vmatpush1.msra.mxu0 0.0
    %1030 = vmatprep.subr.mxu0 0.0
    %1031 = vmatpush1.msra.mxu0 0.0
    %1032 = vmatprep.subr.mxu0 0.0
    %1033 = vmatpush1.msra.mxu0 0.0
    %1034 = vmatprep.subr.mxu0 0.0
    %1035 = vmatpush1.msra.mxu0 0.0
    %1036 = vmatprep.subr.mxu0 0.0
    %1037 = vmatpush1.msra.mxu0 0.0
    %1038 = vmatprep.subr.mxu0 0.0
    %1039 = vmatpush1.msra.mxu0 0.0
    %1040 = vmatprep.subr.mxu0 0.0
    %1041 = vmatpush1.msra.mxu0 0.0
    %1042 = vmatprep.subr.mxu0 0.0
    %1043 = vmatpush1.msra.mxu0 0.0
    %1044 = vmatprep.subr.mxu0 0.0
    %1045 = vmatpush1.msra.mxu0 %v1011
    %1046 = vmatprep.subr.mxu0 0.0
    %1047 = vmatpush1.msra.mxu0 %v1010
    %1048 = vmatprep.subr.mxu0 0.0
    %1049 = vmatpush1.msra.mxu0 %v1009
    %1050 = vmatprep.subr.mxu0 0.0
    %1051 = vmatpush1.msra.mxu0 %v1008
    %1052 = vmatprep.subr.mxu0 0.0
    %1053 = vmatpush2.msra.mxu0 0.0
    %1054 = vmatprep.subr.mxu0 0.0
    %1055 = vmatpush2.msra.mxu0 0.0
    %1056 = vmatprep.subr.mxu0 0.0
    %1057 = vmatpush2.msra.mxu0 0.0
    %1058 = vmatprep.subr.mxu0 0.0
    %1059 = vmatpush2.msra.mxu0 0.0
    %1060 = vmatprep.subr.mxu0 0.0
    %1061 = vmatpush2.msra.mxu0 0.0
    %1062 = vmatprep.subr.mxu0 0.0
    %1063 = vmatpush2.msra.mxu0 0.0
    %1064 = vmatprep.subr.mxu0 0.0
    %1065 = vmatpush2.msra.mxu0 0.0
    %1066 = vmatprep.subr.mxu0 0.0
    %1067 = vmatpush2.msra.mxu0 0.0
    %1068 = vmatprep.subr.mxu0 0.0
    %1069 = vmatpush2.msra.mxu0 0.0
    %1070 = vmatprep.subr.mxu0 0.0
    %1071 = vmatpush2.msra.mxu0 0.0
    %1072 = vmatprep.subr.mxu0 0.0
    %1073 = vmatpush2.msra.mxu0 0.0
    %1074 = vmatprep.subr.mxu0 0.0
    %1075 = vmatpush2.msra.mxu0 0.0
    %1076 = vmatprep.subr.mxu0 0.0
    %1077 = vmatpush2.msra.mxu0 0.0
    %1078 = vmatprep.subr.mxu0 0.0
    %1079 = vmatpush2.msra.mxu0 0.0
    %1080 = vmatprep.subr.mxu0 0.0
    %1081 = vmatpush2.msra.mxu0 0.0
    %1082 = vmatprep.subr.mxu0 0.0
    %1083 = vmatpush2.msra.mxu0 0.0
    %1084 = vmatprep.mubr.f32.mxu0 0.0
    %1085 = vmatmul.mubr.f32.gmra.mxu0 %v1018
    %v1086 = vpop.f32.mrf.mxu0
    %v1087 = vadd.f32 %v1016, %v1086
    %v1088 = vpop.f32.mrf.mxu0
    %1089 = vdwg.mxu0
    %1090 = vst.msk [vmem:[#allocation2] sm:$0xff] %vm25, %v1087
    %v1091 = vsel %vm270, %v834, 0.0
    %1092 = vadd.xlane.f32.xlu0 %v1091
    %v1093 = vpop.xlane.xlu0 %1092
    %v1094 = vrot.slane %v1093, 4
    %v1095 = vadd.f32 %v1093, %v1094
    %v1096 = vrot.slane %v1095, 2
    %v1097 = vadd.f32 %v1095, %v1096
    %v1098 = vrot.slane %v1097, 1
    %v1099 = vadd.f32 %v1097, %v1098
    %s1100 = vtos %v1099
    %s1101 = smul.f32 %s1100, 1.25
    %v1102 = vrcp.pop 64.0
    %s1103 = vtos %v1102
    %s1104 = smul.f32 %s1101, %s1103
    %s1105 = scalar_lea.smem [#allocation5], 0
    %1106 = sst [smem:[%s1105]] %s1104
    %vm1107 = vcmask 122880
    %v1108 = vsel %vm1107, %v845, 0.0
    %1109 = vadd.xlane.f32.xlu0 %v1108
    %v1110 = vpop.xlane.xlu0 %1109
    %v1111 = vrot.slane %v1110, 4
    %v1112 = vadd.f32 %v1110, %v1111
    %v1113 = vrot.slane %v1112, 2
    %v1114 = vadd.f32 %v1112, %v1113
    %v1115 = vrot.slane %v1114, 1
    %v1116 = vadd.f32 %v1114, %v1115
    %s1117 = vtos %v1116
    %s1118 = scvt.f32.s32.to.zero.pseudo %s1117
    %s1119 = scalar_lea.smem [#allocation6], 0
    %1120 = sst [smem:[%s1119]] %s1118
    // Predicated region
    $region10: #{tpu_custom_call.1} parent=1 // pred_check
      _
    $region11: #{tpu_custom_call.1} parent=1 // pred_check_branch
      %1122 = sbr.rel (0) target = $region13
    $region12: #{tpu_custom_call.1} parent=1 // pred_region
      %s1124 = ssub.s32 128, 128
      %1125 = vsyncadd [#allocation3], %s1124
      %s1127 = sshll.u32 [#allocation2], 4
      %s1128 = int_to_ptr.vmem [resolvable:$true] %s1127
      %1130 = dma.vmem_to_hbm [thread:$0]  %s1128, 128, %s2, [#allocation3]
    $region13: #{tpu_custom_call.1} parent=1 // pred_fallthru
      _
    // Predicated region
    $region14: #{tpu_custom_call.1} parent=1 // pred_check
      _
    $region15: #{tpu_custom_call.1} parent=1 // pred_check_branch
      %1132 = sbr.rel (0) target = $region17
    $region16: #{tpu_custom_call.1} parent=1 // pred_region
      %s1134 = ssub.s32 16, 16
      %1135 = vsyncadd [#allocation4], %s1134
      %1138 = dma.smem_to_hbm [#allocation5], 16, %s3, [#allocation4]
    $region17: #{tpu_custom_call.1} parent=1 // pred_fallthru
      _
    // Predicated region
    $region18: #{tpu_custom_call.1} parent=1 // pred_check
      _
    $region19: #{tpu_custom_call.1} parent=1 // pred_check_branch
      %1140 = sbr.rel (0) target = $region21
    $region20: #{tpu_custom_call.1} parent=1 // pred_region
      %s1142 = ssub.s32 16, 16
      %1143 = vsyncadd [#allocation7], %s1142
      %1146 = dma.smem_to_hbm [#allocation6], 16, %s4, [#allocation7]
    $region21: #{tpu_custom_call.1} parent=1 // pred_fallthru
      _
    // Predicated region
    $region22: #{tpu_custom_call.1} parent=1 // pred_check
      _
    $region23: #{tpu_custom_call.1} parent=1 // pred_check_branch
      %1148 = sbr.rel (0) target = $region25
    $region24: #{tpu_custom_call.1} parent=1 // pred_region
      %1149 = dma.done [#allocation3], 128
    $region25: #{tpu_custom_call.1} parent=1 // pred_fallthru
      _
    // Predicated region
    $region26: #{tpu_custom_call.1} parent=1 // pred_check
      _
    $region27: #{tpu_custom_call.1} parent=1 // pred_check_branch
      %1151 = sbr.rel (0) target = $region29
    $region28: #{tpu_custom_call.1} parent=1 // pred_region
      %1152 = dma.done [#allocation4], 16
    $region29: #{tpu_custom_call.1} parent=1 // pred_fallthru
      _
    // Predicated region
    $region30: #{tpu_custom_call.1} parent=1 // pred_check
      _
    $region31: #{tpu_custom_call.1} parent=1 // pred_check_branch
      %1154 = sbr.rel (0) target = $region33
    $region32: #{tpu_custom_call.1} parent=1 // pred_region
      %1155 = dma.done [#allocation7], 16
    $region33: #{tpu_custom_call.1} parent=1 // pred_fallthru
      _
    %1156 = sfence
    %1157 = vsyncpa [#allocation3], 1
    %1158 = vsyncpa [#allocation4], 1
    %1159 = vsyncpa [#allocation7], 1

</llo_original>
